<compile_context>
chip_gen: v6e
topology: v6e:2x2x1
jax: 0.10.0
libtpu: 0.0.40
codegen_flags: <defaults>
</compile_context>

<pallas_src>
import functools

import jax
import jax.numpy as jnp
import numpy as np
from jax.experimental import pallas as pl
from jax.experimental.pallas import tpu as pltpu

_LANES = 128


def _mlp_sigmoid(avg, mx, w1t_ref, w2t_ref):
    """avg, mx: (nb, C) f32. w1t: (C, hidden), w2t: (hidden, C). -> (nb, C)."""
    w1t = w1t_ref[...].astype(jnp.float32)
    w2t = w2t_ref[...].astype(jnp.float32)
    # W2 @ relu(W1 a) + W2 @ relu(W1 m) == W2 @ (relu(W1 a) + relu(W1 m))
    h = (jnp.maximum(jnp.dot(avg, w1t, preferred_element_type=jnp.float32), 0.0)
         + jnp.maximum(jnp.dot(mx, w1t, preferred_element_type=jnp.float32), 0.0))
    z = jnp.dot(h, w2t, preferred_element_type=jnp.float32)
    return 1.0 / (1.0 + jnp.exp(-z))  # sigmoid (EUP exp)


def _ca_kernel_single(x_ref, w1t_ref, w2t_ref, o_ref, *, inv_hw):
    # Whole spatial extent of nb batch elements in one block: (nb, C, HW).
    xv = x_ref[...].astype(jnp.float32)
    avg = jnp.sum(xv, axis=2) * inv_hw      # (nb, C)
    mx = jnp.max(xv, axis=2)                # (nb, C)
    sig = _mlp_sigmoid(avg, mx, w1t_ref, w2t_ref)
    o_ref[...] = sig[:, :, None].astype(o_ref.dtype)


def _ca_kernel_tiled(x_ref, w1t_ref, w2t_ref, o_ref, sum_ref, max_ref, *,
                     hw_total, hw_tile, needs_mask, inv_hw):
    # x_ref: (1, C, hw_tile); sum_ref/max_ref: (1, C, 128) lane-dense accumulators.
    t = pl.program_id(1)
    last = pl.num_programs(1) - 1
    n_chunks = hw_tile // _LANES

    @pl.when(t == 0)
    def _init():
        sum_ref[...] = jnp.zeros_like(sum_ref)
        max_ref[...] = jnp.full_like(max_ref, -jnp.inf)

    def accumulate(masked):
        def body(k, carry):
            s, m = carry
            off = pl.multiple_of(k * _LANES, _LANES)
            chunk = x_ref[:, :, pl.ds(off, _LANES)].astype(jnp.float32)
            if masked:
                col = (jax.lax.broadcasted_iota(jnp.int32, chunk.shape, 2)
                       + t * hw_tile + k * _LANES)
                valid = col < hw_total
                s = s + jnp.where(valid, chunk, 0.0)
                m = jnp.maximum(m, jnp.where(valid, chunk, -jnp.inf))
            else:
                s = s + chunk
                m = jnp.maximum(m, chunk)
            return s, m

        s, m = jax.lax.fori_loop(0, n_chunks, body,
                                 (sum_ref[...], max_ref[...]),
                                 unroll=min(n_chunks, 8))
        sum_ref[...] = s
        max_ref[...] = m

    if needs_mask:
        # Only the last spatial tile pays the iota/compare/select cost.
        @pl.when(t == last)
        def _masked():
            accumulate(True)

        @pl.when(t != last)
        def _unmasked():
            accumulate(False)
    else:
        accumulate(False)

    @pl.when(t == last)
    def _finalize():
        avg = jnp.sum(sum_ref[...], axis=2) * inv_hw   # (1, C)
        mx = jnp.max(max_ref[...], axis=2)             # (1, C)
        sig = _mlp_sigmoid(avg, mx, w1t_ref, w2t_ref)
        o_ref[...] = sig[:, :, None].astype(o_ref.dtype)


def channel_attention_forward(x, w1, w2, *, block_bytes=8 * 1024 * 1024):
    """ChannelAttention forward.

    x  : (N, C, H, W)
    w1 : (C // ratio, C, 1, 1)  first 1x1 conv weight (bias=False)
    w2 : (C, C // ratio, 1, 1)  second 1x1 conv weight (bias=False)
    returns (N, C, 1, 1)
    """
    N, C, H, W = x.shape
    hidden = w1.shape[0]
    HW = H * W
    inv_hw = 1.0 / float(HW)

    # Free reshapes of x only; tiny weight transposes happen host-side.
    x_flat = x.reshape(N, C, HW)
    w1t = w1.reshape(hidden, C).T            # (C, hidden)
    w2t = w2.reshape(C, hidden).T            # (hidden, C)

    elem_bytes = x.dtype.itemsize
    per_elem = elem_bytes * C * HW           # one batch element's spatial plane

    cost = pl.CostEstimate(
        flops=3 * N * C * HW + 8 * N * C * hidden,
        transcendentals=N * C,
        bytes_accessed=elem_bytes * N * C * HW + 4 * (2 * C * hidden + N * C),
    )

    if per_elem <= block_bytes or HW <= _LANES:
        # ---- Case A: whole spatial plane per block; aggregate batch elements. ----
        nb_cap = max(1, block_bytes // max(per_elem, 1))
        nb = 1
        for d in range(min(N, nb_cap), 0, -1):   # largest divisor of N that fits
            if N % d == 0:
                nb = d
                break
        num_b = N // nb
        x_block_bytes = elem_bytes * nb * C * HW

        kernel = functools.partial(_ca_kernel_single, inv_hw=inv_hw)
        grid_spec = pltpu.PrefetchScalarGridSpec(
            num_scalar_prefetch=0,
            grid=(num_b,),
            in_specs=[
                pl.BlockSpec((nb, C, HW), lambda b: (b, 0, 0)),
                pl.BlockSpec((C, hidden), lambda b: (0, 0)),
                pl.BlockSpec((hidden, C), lambda b: (0, 0)),
            ],
            out_specs=pl.BlockSpec((nb, C, 1), lambda b: (b, 0, 0)),
            scratch_shapes=[],
        )
        dim_sem = ("parallel",)
    else:
        # ---- Case B: tile the spatial axis (reduction), one batch element/block. ----
        hw_tile = max(_LANES,
                      (block_bytes // (elem_bytes * C)) // _LANES * _LANES)
        hw_tile = min(hw_tile, (HW // _LANES) * _LANES)   # lane-dense, <= HW
        num_t = pl.cdiv(HW, hw_tile)
        needs_mask = (HW % hw_tile) != 0
        x_block_bytes = elem_bytes * C * hw_tile

        kernel = functools.partial(_ca_kernel_tiled, hw_total=HW, hw_tile=hw_tile,
                                   needs_mask=needs_mask, inv_hw=inv_hw)
        grid_spec = pltpu.PrefetchScalarGridSpec(
            num_scalar_prefetch=0,
            grid=(N, num_t),                 # batch parallel, reduction axis last
            in_specs=[
                pl.BlockSpec((1, C, hw_tile), lambda b, t: (b, 0, t)),
                pl.BlockSpec((C, hidden), lambda b, t: (0, 0)),
                pl.BlockSpec((hidden, C), lambda b, t: (0, 0)),
            ],
            out_specs=pl.BlockSpec((1, C, 1), lambda b, t: (b, 0, 0)),
            scratch_shapes=[
                pltpu.VMEM((1, C, _LANES), jnp.float32),  # lane-dense running sum
                pltpu.VMEM((1, C, _LANES), jnp.float32),  # lane-dense running max
            ],
        )
        dim_sem = ("parallel", "arbitrary")

    # Explicit VMEM budget: double-buffered x blocks + weights + out + scratch.
    weight_bytes = 4 * 2 * C * hidden
    scratch_bytes = 2 * 4 * C * _LANES
    needed = (2 * x_block_bytes + 2 * weight_bytes + 2 * 4 * N * C + scratch_bytes)
    vmem_limit = int(min(max(needed + (8 << 20), 32 << 20), 96 << 20))

    out = pl.pallas_call(
        kernel,
        out_shape=jax.ShapeDtypeStruct((N, C, 1), x.dtype),
        grid_spec=grid_spec,
        compiler_params=pltpu.CompilerParams(
            dimension_semantics=dim_sem,
            vmem_limit_bytes=vmem_limit,
        ),
        cost_estimate=cost,
    )(x_flat, w1t, w2t)

    return out.reshape(N, C, 1, 1)


if __name__ == "__main__":
    key = jax.random.PRNGKey(0)
    kx, k1, k2 = jax.random.split(key, 3)

    # Small shapes consistent with the module: batch=2, in_planes=32, ratio=4,
    # 16x16 spatial -> hidden = 8.
    N, C, H, W = 2, 32, 16, 16
    ratio = 4
    hidden = C // ratio

    x = jax.random.normal(kx, (N, C, H, W), dtype=jnp.float32)
    w1 = jax.random.normal(k1, (hidden, C, 1, 1), dtype=jnp.float32) * (1.0 / np.sqrt(C))
    w2 = jax.random.normal(k2, (C, hidden, 1, 1), dtype=jnp.float32) * (1.0 / np.sqrt(hidden))

    out = channel_attention_forward(x, w1, w2)
    out = jax.block_until_ready(out)

    # Pure-JAX reference matching the PyTorch module exactly.
    avg = jnp.mean(x, axis=(2, 3))                     # (N, C)
    mx = jnp.max(x, axis=(2, 3))                       # (N, C)
    w1m = w1.reshape(hidden, C)
    w2m = w2.reshape(C, hidden)

    def mlp_ref(v):
        return jnp.maximum(v @ w1m.T, 0.0) @ w2m.T

    ref = jax.nn.sigmoid(mlp_ref(avg) + mlp_ref(mx)).reshape(N, C, 1, 1)

    np.testing.assert_allclose(np.asarray(out), np.asarray(ref),
                               rtol=1e-5, atol=1e-5)
    assert out.shape == (N, C, 1, 1)

    print("KERNEL_OK")
</pallas_src>

<mosaic_0001>
module attributes {stable_mosaic.version = 11 : i64} {
  func.func @_ca_kernel_single(%arg0: i32, %arg1: memref<2x32x256xf32, #tpu.memory_space<vmem>>, %arg2: memref<32x8xf32, #tpu.memory_space<vmem>>, %arg3: memref<8x32xf32, #tpu.memory_space<vmem>>, %arg4: memref<2x32x1xf32, #tpu.memory_space<vmem>>) attributes {dimension_semantics = [#tpu.dimension_semantics<parallel>], iteration_bounds = array<i64: 1>, scalar_prefetch = 0 : i64, scratch_operands = 0 : i64, tpu.core_type = #tpu.core_type<tc>, window_params = [{transform_indices = @transform_0, window_bounds = array<i64: 2, 32, 256>}, {pipeline_mode = #tpu.pipeline_mode<synchronous>, transform_indices = @transform_1, window_bounds = array<i64: 32, 8>}, {pipeline_mode = #tpu.pipeline_mode<synchronous>, transform_indices = @transform_2, window_bounds = array<i64: 8, 32>}, {transform_indices = @transform_3, window_bounds = array<i64: 2, 32, 1>}]} {
    %c0 = arith.constant 0 : index
    %c0_0 = arith.constant 0 : index
    %c0_1 = arith.constant 0 : index
    %0 = vector.load %arg1[%c0, %c0_0, %c0_1] : memref<2x32x256xf32, #tpu.memory_space<vmem>>, vector<2x32x256xf32>
    %cst = arith.constant dense<0.000000e+00> : vector<2x32xf32>
    %1 = vector.multi_reduction <add>, %0, %cst [2] : vector<2x32x256xf32> to vector<2x32xf32>
    %cst_2 = arith.constant 3.906250e-03 : f32
    %2 = vector.broadcast %cst_2 : f32 to vector<2x32xf32>
    %3 = arith.mulf %1, %2 : vector<2x32xf32>
    %cst_3 = arith.constant dense<0xFF800000> : vector<2x32xf32>
    %4 = vector.multi_reduction <maximumf>, %0, %cst_3 [2] : vector<2x32x256xf32> to vector<2x32xf32>
    %c0_4 = arith.constant 0 : index
    %c0_5 = arith.constant 0 : index
    %5 = vector.load %arg2[%c0_4, %c0_5] : memref<32x8xf32, #tpu.memory_space<vmem>>, vector<32x8xf32>
    %c0_6 = arith.constant 0 : index
    %c0_7 = arith.constant 0 : index
    %6 = vector.load %arg3[%c0_6, %c0_7] : memref<8x32xf32, #tpu.memory_space<vmem>>, vector<8x32xf32>
    %cst_8 = arith.constant dense<0.000000e+00> : vector<2x8xf32>
    %7 = tpu.matmul %3, %5, %cst_8 {dimension_numbers = #tpu.dot_dimension_numbers<[1], [0], [0], [1], [0, 0, 1, 1], [], []>} : vector<2x32xf32>, vector<32x8xf32>, vector<2x8xf32> -> vector<2x8xf32>
    %cst_9 = arith.constant 0.000000e+00 : f32
    %8 = vector.broadcast %cst_9 : f32 to vector<2x8xf32>
    %9 = arith.maximumf %7, %8 : vector<2x8xf32>
    %cst_10 = arith.constant dense<0.000000e+00> : vector<2x8xf32>
    %10 = tpu.matmul %4, %5, %cst_10 {dimension_numbers = #tpu.dot_dimension_numbers<[1], [0], [0], [1], [0, 0, 1, 1], [], []>} : vector<2x32xf32>, vector<32x8xf32>, vector<2x8xf32> -> vector<2x8xf32>
    %cst_11 = arith.constant 0.000000e+00 : f32
    %11 = vector.broadcast %cst_11 : f32 to vector<2x8xf32>
    %12 = arith.maximumf %10, %11 : vector<2x8xf32>
    %13 = arith.addf %9, %12 : vector<2x8xf32>
    %cst_12 = arith.constant dense<0.000000e+00> : vector<2x32xf32>
    %14 = tpu.matmul %13, %6, %cst_12 {dimension_numbers = #tpu.dot_dimension_numbers<[1], [0], [0], [1], [0, 0, 1, 1], [], []>} : vector<2x8xf32>, vector<8x32xf32>, vector<2x32xf32> -> vector<2x32xf32>
    %cst_13 = arith.constant 0.000000e+00 : f32
    %15 = vector.broadcast %cst_13 : f32 to vector<2x32xf32>
    %16 = arith.subf %15, %14 : vector<2x32xf32>
    %17 = math.exp %16 : vector<2x32xf32>
    %cst_14 = arith.constant 1.000000e+00 : f32
    %18 = vector.broadcast %cst_14 : f32 to vector<2x32xf32>
    %19 = arith.addf %18, %17 : vector<2x32xf32>
    %cst_15 = arith.constant 1.000000e+00 : f32
    %20 = vector.broadcast %cst_15 : f32 to vector<2x32xf32>
    %21 = arith.divf %20, %19 : vector<2x32xf32>
    %22 = vector.shape_cast %21 : vector<2x32xf32> to vector<2x32x1xf32>
    %c0_16 = arith.constant 0 : index
    %c0_17 = arith.constant 0 : index
    %c0_18 = arith.constant 0 : index
    %23 = vector.load %arg4[%c0_16, %c0_17, %c0_18] : memref<2x32x1xf32, #tpu.memory_space<vmem>>, vector<2x32x1xf32>
    tpu.vector_store %arg4[%c0_16, %c0_17, %c0_18], %22 {strides = array<i32>} : memref<2x32x1xf32, #tpu.memory_space<vmem>>, vector<2x32x1xf32>,
    return
  }
  func.func @transform_0(%arg0: i32) -> (i32, i32, i32) {
    %c0_i32 = arith.constant 0 : i32
    %c0_i32_0 = arith.constant 0 : i32
    %c0_i32_1 = arith.constant 0 : i32
    return %arg0, %c0_i32, %c0_i32_0 : i32, i32, i32
  }
  func.func @transform_1(%arg0: i32) -> (i32, i32) {
    %c0_i32 = arith.constant 0 : i32
    %c0_i32_0 = arith.constant 0 : i32
    %c0_i32_1 = arith.constant 0 : i32
    return %c0_i32, %c0_i32_0 : i32, i32
  }
  func.func @transform_2(%arg0: i32) -> (i32, i32) {
    %c0_i32 = arith.constant 0 : i32
    %c0_i32_0 = arith.constant 0 : i32
    %c0_i32_1 = arith.constant 0 : i32
    return %c0_i32, %c0_i32_0 : i32, i32
  }
  func.func @transform_3(%arg0: i32) -> (i32, i32, i32) {
    %c0_i32 = arith.constant 0 : i32
    %c0_i32_0 = arith.constant 0 : i32
    %c0_i32_1 = arith.constant 0 : i32
    return %arg0, %c0_i32, %c0_i32_0 : i32, i32, i32
  }
}

</mosaic_0001>

<llo_original>
// kernel: tpu_custom_call.1
$region0: #{tpu_custom_call.1}
  #allocation0 [shape = 'u32[]', space=smem, size = 0x4, offset = 0x4, fixed_abs, tag = 'smem constant byte address 0x4 - core index']
  #allocation1 [shape = 'u32[144,128]{1,0:T(1,128)}', space=vmem, size = 0x12000, scoped, tag = 'internal scratch']
  %s0 = inlined_call_operand.hbm [shape: f32[2,32,256], index: 0, kind: input, shape index: {}]
  %s1 = inlined_call_operand.vmem [shape: f32[32,8], index: 1, kind: input, shape index: {}]
  %s2 = inlined_call_operand.vmem [shape: f32[8,32], index: 2, kind: input, shape index: {}]
  %s3 = inlined_call_operand.vmem [shape: f32[2,32,1], index: 3, kind: output, shape index: {}]
  %s4 = sld [smem:[#allocation0]]
  $region26: #{tpu_custom_call.1} parent=0
    _
  %s6 = ssub.s32 1, %s4
  %s7 = scalar_select 0, %s6, %s4
  $region1: #{tpu_custom_call.1} parent=0
    #allocation2 [shape = 'u8[65536]{0}', space=vmem, size = 0x10000, scoped, tag = 'input window, operand 0, single buffered']
    #allocation3 [shape = 's32[1]{0}', space=sflag, size = 0x4, scoped, tag = 'scoped memory for tpu_custom_call.1']
    %8 = vsyncpa [#allocation3], 0
    // Predicated region
    $region2: #{tpu_custom_call.1} parent=1 // pred_check
      _
    $region3: #{tpu_custom_call.1} parent=1 // pred_check_branch
      %10 = sbr.rel (0) target = $region5
    $region4: #{tpu_custom_call.1} parent=1 // pred_region
      %s12 = ssub.s32 2048, 2048
      %13 = vsyncadd [#allocation3], %s12
      %s14 = sshll.u32 [#allocation2], 4
      %s15 = int_to_ptr.vmem [resolvable:$true] %s14
      %20 = dma.hbm_to_vmem [thread:$0]  %s0, 2048, %s15, [#allocation3], 256, 256, 16
    $region5: #{tpu_custom_call.1} parent=1 // pred_fallthru
      _
    // Predicated region
    $region6: #{tpu_custom_call.1} parent=1 // pred_check
      _
    $region7: #{tpu_custom_call.1} parent=1 // pred_check_branch
      %22 = sbr.rel (0) target = $region9
    $region8: #{tpu_custom_call.1} parent=1 // pred_region
      _
    $region9: #{tpu_custom_call.1} parent=1 // pred_fallthru
      _
    // Predicated region
    $region10: #{tpu_custom_call.1} parent=1 // pred_check
      _
    $region11: #{tpu_custom_call.1} parent=1 // pred_check_branch
      %24 = sbr.rel (0) target = $region13
    $region12: #{tpu_custom_call.1} parent=1 // pred_region
      _
    $region13: #{tpu_custom_call.1} parent=1 // pred_fallthru
      _
    // Predicated region
    $region14: #{tpu_custom_call.1} parent=1 // pred_check
      _
    $region15: #{tpu_custom_call.1} parent=1 // pred_check_branch
      %26 = sbr.rel (0) target = $region17
    $region16: #{tpu_custom_call.1} parent=1 // pred_region
      %27 = dma.done [#allocation3], 2048
    $region17: #{tpu_custom_call.1} parent=1 // pred_fallthru
      _
    %v28 = vld [vmem:[#allocation2] sm:$0xff]
    %v29 = vld [vmem:[#allocation2 + $0x8] sm:$0xff]
    %v30 = vld [vmem:[#allocation2 + $0x10] sm:$0xff]
    %v31 = vld [vmem:[#allocation2 + $0x18] sm:$0xff]
    %v32 = vld [vmem:[#allocation2 + $0x20] sm:$0xff]
    %v33 = vld [vmem:[#allocation2 + $0x28] sm:$0xff]
    %v34 = vld [vmem:[#allocation2 + $0x30] sm:$0xff]
    %v35 = vld [vmem:[#allocation2 + $0x38] sm:$0xff]
    %v36 = vld [vmem:[#allocation2 + $0x40] sm:$0xff]
    %v37 = vld [vmem:[#allocation2 + $0x48] sm:$0xff]
    %v38 = vld [vmem:[#allocation2 + $0x50] sm:$0xff]
    %v39 = vld [vmem:[#allocation2 + $0x58] sm:$0xff]
    %v40 = vld [vmem:[#allocation2 + $0x60] sm:$0xff]
    %v41 = vld [vmem:[#allocation2 + $0x68] sm:$0xff]
    %v42 = vld [vmem:[#allocation2 + $0x70] sm:$0xff]
    %v43 = vld [vmem:[#allocation2 + $0x78] sm:$0xff]
    %v44 = vadd.f32 %v28, %v29
    %45 = vadd.xlane.f32.xlu0 %v44
    %v46 = vpop.xlane.xlu0 %45
    %v47 = vadd.f32 %v30, %v31
    %48 = vadd.xlane.f32.xlu0 %v47
    %v49 = vpop.xlane.xlu0 %48
    %v50 = vadd.f32 %v32, %v33
    %51 = vadd.xlane.f32.xlu0 %v50
    %v52 = vpop.xlane.xlu0 %51
    %v53 = vadd.f32 %v34, %v35
    %54 = vadd.xlane.f32.xlu0 %v53
    %v55 = vpop.xlane.xlu0 %54
    %v56 = vadd.f32 %v36, %v37
    %57 = vadd.xlane.f32.xlu0 %v56
    %v58 = vpop.xlane.xlu0 %57
    %v59 = vadd.f32 %v38, %v39
    %60 = vadd.xlane.f32.xlu0 %v59
    %v61 = vpop.xlane.xlu0 %60
    %v62 = vadd.f32 %v40, %v41
    %63 = vadd.xlane.f32.xlu0 %v62
    %v64 = vpop.xlane.xlu0 %63
    %v65 = vadd.f32 %v42, %v43
    %66 = vadd.xlane.f32.xlu0 %v65
    %v67 = vpop.xlane.xlu0 %66
    %v68 = vmul.f32 %v46, 0.00390625
    %v69 = vmul.f32 %v49, 0.00390625
    %v70 = vmul.f32 %v52, 0.00390625
    %v71 = vmul.f32 %v55, 0.00390625
    %v72 = vmul.f32 %v58, 0.00390625
    %v73 = vmul.f32 %v61, 0.00390625
    %v74 = vmul.f32 %v64, 0.00390625
    %v75 = vmul.f32 %v67, 0.00390625
    %v76 = vmax.f32 %v28, %v29
    %77 = vmax.xlane.f32.xlu0 %v76
    %v78 = vpop.xlane.xlu0 %77
    %v79 = vmax.f32 %v30, %v31
    %80 = vmax.xlane.f32.xlu0 %v79
    %v81 = vpop.xlane.xlu0 %80
    %v82 = vmax.f32 %v32, %v33
    %83 = vmax.xlane.f32.xlu0 %v82
    %v84 = vpop.xlane.xlu0 %83
    %v85 = vmax.f32 %v34, %v35
    %86 = vmax.xlane.f32.xlu0 %v85
    %v87 = vpop.xlane.xlu0 %86
    %v88 = vmax.f32 %v36, %v37
    %89 = vmax.xlane.f32.xlu0 %v88
    %v90 = vpop.xlane.xlu0 %89
    %v91 = vmax.f32 %v38, %v39
    %92 = vmax.xlane.f32.xlu0 %v91
    %v93 = vpop.xlane.xlu0 %92
    %v94 = vmax.f32 %v40, %v41
    %95 = vmax.xlane.f32.xlu0 %v94
    %v96 = vpop.xlane.xlu0 %95
    %v97 = vmax.f32 %v42, %v43
    %98 = vmax.xlane.f32.xlu0 %v97
    %v99 = vpop.xlane.xlu0 %98
    %v100 = vld [vmem:[%s1] sm:$0xff]
    %v101 = vld [vmem:[%s1 + $0x8] sm:$0xff]
    %v102 = vld [vmem:[%s1 + $0x10] sm:$0xff]
    %v103 = vld [vmem:[%s1 + $0x18] sm:$0xff]
    %v104 = vld [vmem:[%s2] sm:$0xff]
    %v113 = vlaneseq
    %v114 = vand.u32 %v113, 127
    %v115 = vlaneseq
    %v116 = vshrl.u32 %v115, 7
    %v117 = vsub.s32 %v114, %v116
    %v118 = vrot.slane %v68, %v117
    %v119 = vadd.s32 %v114, 4294967288
    %v120 = vlaneseq
    %v121 = vshrl.u32 %v120, 7
    %v122 = vsub.s32 %v119, %v121
    %v123 = vrot.slane %v69, %v122
    %vm124 = vcmask 130112
    %v125 = vsel %vm124, %v123, %v118
    %v126 = vadd.s32 %v114, 4294967280
    %v127 = vlaneseq
    %v128 = vshrl.u32 %v127, 7
    %v129 = vsub.s32 %v126, %v128
    %v130 = vrot.slane %v70, %v129
    %vm131 = vcmask 195712
    %v132 = vsel %vm131, %v130, %v125
    %v133 = vadd.s32 %v114, 4294967272
    %v134 = vlaneseq
    %v135 = vshrl.u32 %v134, 7
    %v136 = vsub.s32 %v133, %v135
    %v137 = vrot.slane %v71, %v136
    %vm138 = vcmask 261312
    %v139 = vsel %vm138, %v137, %v132
    %v140 = vlaneseq
    %v141 = vshrl.u32 %v140, 7
    %v142 = vsub.s32 %v114, %v141
    %v143 = vrot.slane %v72, %v142
    %v144 = vlaneseq
    %v145 = vshrl.u32 %v144, 7
    %v146 = vsub.s32 %v119, %v145
    %v147 = vrot.slane %v73, %v146
    %v148 = vsel %vm124, %v147, %v143
    %v149 = vlaneseq
    %v150 = vshrl.u32 %v149, 7
    %v151 = vsub.s32 %v126, %v150
    %v152 = vrot.slane %v74, %v151
    %v153 = vsel %vm131, %v152, %v148
    %v154 = vlaneseq
    %v155 = vshrl.u32 %v154, 7
    %v156 = vsub.s32 %v133, %v155
    %v157 = vrot.slane %v75, %v156
    %v158 = vsel %vm138, %v157, %v153
    %vm159 = vcmask 1041409
    %v160 = vsel %vm159, %v158, %v139
    %vm161 = vcmask 261120
    %v162 = vsel %vm161, %v160, 0
    %164 = vmatprep.subr.mxu0 0.0
    %165 = vmatpush1.msra.mxu0 0.0
    %166 = vmatprep.subr.mxu0 0.0
    %167 = vmatpush1.msra.mxu0 0.0
    %168 = vmatprep.subr.mxu0 0.0
    %169 = vmatpush1.msra.mxu0 0.0
    %170 = vmatprep.subr.mxu0 0.0
    %171 = vmatpush1.msra.mxu0 0.0
    %172 = vmatprep.subr.mxu0 0.0
    %173 = vmatpush1.msra.mxu0 0.0
    %174 = vmatprep.subr.mxu0 0.0
    %175 = vmatpush1.msra.mxu0 0.0
    %176 = vmatprep.subr.mxu0 0.0
    %177 = vmatpush1.msra.mxu0 0.0
    %178 = vmatprep.subr.mxu0 0.0
    %179 = vmatpush1.msra.mxu0 0.0
    %180 = vmatprep.subr.mxu0 0.0
    %181 = vmatpush1.msra.mxu0 0.0
    %182 = vmatprep.subr.mxu0 0.0
    %183 = vmatpush1.msra.mxu0 0.0
    %184 = vmatprep.subr.mxu0 0.0
    %185 = vmatpush1.msra.mxu0 0.0
    %186 = vmatprep.subr.mxu0 0.0
    %187 = vmatpush1.msra.mxu0 0.0
    %188 = vmatprep.subr.mxu0 0.0
    %189 = vmatpush1.msra.mxu0 %v103
    %190 = vmatprep.subr.mxu0 0.0
    %191 = vmatpush1.msra.mxu0 %v102
    %192 = vmatprep.subr.mxu0 0.0
    %193 = vmatpush1.msra.mxu0 %v101
    %194 = vmatprep.subr.mxu0 0.0
    %195 = vmatpush1.msra.mxu0 %v100
    %196 = vmatprep.subr.mxu0 0.0
    %197 = vmatpush2.msra.mxu0 0.0
    %198 = vmatprep.subr.mxu0 0.0
    %199 = vmatpush2.msra.mxu0 0.0
    %200 = vmatprep.subr.mxu0 0.0
    %201 = vmatpush2.msra.mxu0 0.0
    %202 = vmatprep.subr.mxu0 0.0
    %203 = vmatpush2.msra.mxu0 0.0
    %204 = vmatprep.subr.mxu0 0.0
    %205 = vmatpush2.msra.mxu0 0.0
    %206 = vmatprep.subr.mxu0 0.0
    %207 = vmatpush2.msra.mxu0 0.0
    %208 = vmatprep.subr.mxu0 0.0
    %209 = vmatpush2.msra.mxu0 0.0
    %210 = vmatprep.subr.mxu0 0.0
    %211 = vmatpush2.msra.mxu0 0.0
    %212 = vmatprep.subr.mxu0 0.0
    %213 = vmatpush2.msra.mxu0 0.0
    %214 = vmatprep.subr.mxu0 0.0
    %215 = vmatpush2.msra.mxu0 0.0
    %216 = vmatprep.subr.mxu0 0.0
    %217 = vmatpush2.msra.mxu0 0.0
    %218 = vmatprep.subr.mxu0 0.0
    %219 = vmatpush2.msra.mxu0 0.0
    %220 = vmatprep.subr.mxu0 0.0
    %221 = vmatpush2.msra.mxu0 0.0
    %222 = vmatprep.subr.mxu0 0.0
    %223 = vmatpush2.msra.mxu0 0.0
    %224 = vmatprep.subr.mxu0 0.0
    %225 = vmatpush2.msra.mxu0 0.0
    %226 = vmatprep.subr.mxu0 0.0
    %227 = vmatpush2.msra.mxu0 0.0
    %228 = vmatprep.mubr.f32.mxu0 0.0
    %229 = vmatmul.mubr.f32.gmra.mxu0 %v162
    %v230 = vpop.f32.mrf.mxu0
    %v231 = vadd.f32 0.0, %v230
    %v232 = vpop.f32.mrf.mxu0
    %233 = vdwg.mxu0
    %v234 = vmax.f32 %v231, 0.0
    %v243 = vlaneseq
    %v244 = vshrl.u32 %v243, 7
    %v245 = vsub.s32 %v114, %v244
    %v246 = vrot.slane %v78, %v245
    %v247 = vlaneseq
    %v248 = vshrl.u32 %v247, 7
    %v249 = vsub.s32 %v119, %v248
    %v250 = vrot.slane %v81, %v249
    %v251 = vsel %vm124, %v250, %v246
    %v252 = vlaneseq
    %v253 = vshrl.u32 %v252, 7
    %v254 = vsub.s32 %v126, %v253
    %v255 = vrot.slane %v84, %v254
    %v256 = vsel %vm131, %v255, %v251
    %v257 = vlaneseq
    %v258 = vshrl.u32 %v257, 7
    %v259 = vsub.s32 %v133, %v258
    %v260 = vrot.slane %v87, %v259
    %v261 = vsel %vm138, %v260, %v256
    %v262 = vlaneseq
    %v263 = vshrl.u32 %v262, 7
    %v264 = vsub.s32 %v114, %v263
    %v265 = vrot.slane %v90, %v264
    %v266 = vlaneseq
    %v267 = vshrl.u32 %v266, 7
    %v268 = vsub.s32 %v119, %v267
    %v269 = vrot.slane %v93, %v268
    %v270 = vsel %vm124, %v269, %v265
    %v271 = vlaneseq
    %v272 = vshrl.u32 %v271, 7
    %v273 = vsub.s32 %v126, %v272
    %v274 = vrot.slane %v96, %v273
    %v275 = vsel %vm131, %v274, %v270
    %v276 = vlaneseq
    %v277 = vshrl.u32 %v276, 7
    %v278 = vsub.s32 %v133, %v277
    %v279 = vrot.slane %v99, %v278
    %v280 = vsel %vm138, %v279, %v275
    %v281 = vsel %vm159, %v280, %v261
    %v282 = vsel %vm161, %v281, 0
    %284 = vmatprep.subr.mxu0 0.0
    %285 = vmatpush1.msra.mxu0 0.0
    %286 = vmatprep.subr.mxu0 0.0
    %287 = vmatpush1.msra.mxu0 0.0
    %288 = vmatprep.subr.mxu0 0.0
    %289 = vmatpush1.msra.mxu0 0.0
    %290 = vmatprep.subr.mxu0 0.0
    %291 = vmatpush1.msra.mxu0 0.0
    %292 = vmatprep.subr.mxu0 0.0
    %293 = vmatpush1.msra.mxu0 0.0
    %294 = vmatprep.subr.mxu0 0.0
    %295 = vmatpush1.msra.mxu0 0.0
    %296 = vmatprep.subr.mxu0 0.0
    %297 = vmatpush1.msra.mxu0 0.0
    %298 = vmatprep.subr.mxu0 0.0
    %299 = vmatpush1.msra.mxu0 0.0
    %300 = vmatprep.subr.mxu0 0.0
    %301 = vmatpush1.msra.mxu0 0.0
    %302 = vmatprep.subr.mxu0 0.0
    %303 = vmatpush1.msra.mxu0 0.0
    %304 = vmatprep.subr.mxu0 0.0
    %305 = vmatpush1.msra.mxu0 0.0
    %306 = vmatprep.subr.mxu0 0.0
    %307 = vmatpush1.msra.mxu0 0.0
    %308 = vmatprep.subr.mxu0 0.0
    %309 = vmatpush1.msra.mxu0 %v103
    %310 = vmatprep.subr.mxu0 0.0
    %311 = vmatpush1.msra.mxu0 %v102
    %312 = vmatprep.subr.mxu0 0.0
    %313 = vmatpush1.msra.mxu0 %v101
    %314 = vmatprep.subr.mxu0 0.0
    %315 = vmatpush1.msra.mxu0 %v100
    %316 = vmatprep.subr.mxu0 0.0
    %317 = vmatpush2.msra.mxu0 0.0
    %318 = vmatprep.subr.mxu0 0.0
    %319 = vmatpush2.msra.mxu0 0.0
    %320 = vmatprep.subr.mxu0 0.0
    %321 = vmatpush2.msra.mxu0 0.0
    %322 = vmatprep.subr.mxu0 0.0
    %323 = vmatpush2.msra.mxu0 0.0
    %324 = vmatprep.subr.mxu0 0.0
    %325 = vmatpush2.msra.mxu0 0.0
    %326 = vmatprep.subr.mxu0 0.0
    %327 = vmatpush2.msra.mxu0 0.0
    %328 = vmatprep.subr.mxu0 0.0
    %329 = vmatpush2.msra.mxu0 0.0
    %330 = vmatprep.subr.mxu0 0.0
    %331 = vmatpush2.msra.mxu0 0.0
    %332 = vmatprep.subr.mxu0 0.0
    %333 = vmatpush2.msra.mxu0 0.0
    %334 = vmatprep.subr.mxu0 0.0
    %335 = vmatpush2.msra.mxu0 0.0
    %336 = vmatprep.subr.mxu0 0.0
    %337 = vmatpush2.msra.mxu0 0.0
    %338 = vmatprep.subr.mxu0 0.0
    %339 = vmatpush2.msra.mxu0 0.0
    %340 = vmatprep.subr.mxu0 0.0
    %341 = vmatpush2.msra.mxu0 0.0
    %342 = vmatprep.subr.mxu0 0.0
    %343 = vmatpush2.msra.mxu0 0.0
    %344 = vmatprep.subr.mxu0 0.0
    %345 = vmatpush2.msra.mxu0 0.0
    %346 = vmatprep.subr.mxu0 0.0
    %347 = vmatpush2.msra.mxu0 0.0
    %348 = vmatprep.mubr.f32.mxu0 0.0
    %349 = vmatmul.mubr.f32.gmra.mxu0 %v282
    %v350 = vpop.f32.mrf.mxu0
    %v351 = vadd.f32 0.0, %v350
    %v352 = vpop.f32.mrf.mxu0
    %353 = vdwg.mxu0
    %v354 = vmax.f32 %v351, 0.0
    %v355 = vadd.f32 %v234, %v354
    %vm356 = vcmask 64512
    %v358 = vsel %vm356, %v355, 0
    %360 = vmatprep.subr.mxu0 0.0
    %361 = vmatpush1.msra.mxu0 0.0
    %362 = vmatprep.subr.mxu0 0.0
    %363 = vmatpush1.msra.mxu0 0.0
    %364 = vmatprep.subr.mxu0 0.0
    %365 = vmatpush1.msra.mxu0 0.0
    %366 = vmatprep.subr.mxu0 0.0
    %367 = vmatpush1.msra.mxu0 0.0
    %368 = vmatprep.subr.mxu0 0.0
    %369 = vmatpush1.msra.mxu0 0.0
    %370 = vmatprep.subr.mxu0 0.0
    %371 = vmatpush1.msra.mxu0 0.0
    %372 = vmatprep.subr.mxu0 0.0
    %373 = vmatpush1.msra.mxu0 0.0
    %374 = vmatprep.subr.mxu0 0.0
    %375 = vmatpush1.msra.mxu0 0.0
    %376 = vmatprep.subr.mxu0 0.0
    %377 = vmatpush1.msra.mxu0 0.0
    %378 = vmatprep.subr.mxu0 0.0
    %379 = vmatpush1.msra.mxu0 0.0
    %380 = vmatprep.subr.mxu0 0.0
    %381 = vmatpush1.msra.mxu0 0.0
    %382 = vmatprep.subr.mxu0 0.0
    %383 = vmatpush1.msra.mxu0 0.0
    %384 = vmatprep.subr.mxu0 0.0
    %385 = vmatpush1.msra.mxu0 0.0
    %386 = vmatprep.subr.mxu0 0.0
    %387 = vmatpush1.msra.mxu0 0.0
    %388 = vmatprep.subr.mxu0 0.0
    %389 = vmatpush1.msra.mxu0 0.0
    %390 = vmatprep.subr.mxu0 0.0
    %391 = vmatpush1.msra.mxu0 %v104
    %392 = vmatprep.subr.mxu0 0.0
    %393 = vmatpush2.msra.mxu0 0.0
    %394 = vmatprep.subr.mxu0 0.0
    %395 = vmatpush2.msra.mxu0 0.0
    %396 = vmatprep.subr.mxu0 0.0
    %397 = vmatpush2.msra.mxu0 0.0
    %398 = vmatprep.subr.mxu0 0.0
    %399 = vmatpush2.msra.mxu0 0.0
    %400 = vmatprep.subr.mxu0 0.0
    %401 = vmatpush2.msra.mxu0 0.0
    %402 = vmatprep.subr.mxu0 0.0
    %403 = vmatpush2.msra.mxu0 0.0
    %404 = vmatprep.subr.mxu0 0.0
    %405 = vmatpush2.msra.mxu0 0.0
    %406 = vmatprep.subr.mxu0 0.0
    %407 = vmatpush2.msra.mxu0 0.0
    %408 = vmatprep.subr.mxu0 0.0
    %409 = vmatpush2.msra.mxu0 0.0
    %410 = vmatprep.subr.mxu0 0.0
    %411 = vmatpush2.msra.mxu0 0.0
    %412 = vmatprep.subr.mxu0 0.0
    %413 = vmatpush2.msra.mxu0 0.0
    %414 = vmatprep.subr.mxu0 0.0
    %415 = vmatpush2.msra.mxu0 0.0
    %416 = vmatprep.subr.mxu0 0.0
    %417 = vmatpush2.msra.mxu0 0.0
    %418 = vmatprep.subr.mxu0 0.0
    %419 = vmatpush2.msra.mxu0 0.0
    %420 = vmatprep.subr.mxu0 0.0
    %421 = vmatpush2.msra.mxu0 0.0
    %422 = vmatprep.subr.mxu0 0.0
    %423 = vmatpush2.msra.mxu0 0.0
    %424 = vmatprep.mubr.f32.mxu0 0.0
    %425 = vmatmul.mubr.f32.gmra.mxu0 %v358
    %v426 = vpop.f32.mrf.mxu0
    %v427 = vadd.f32 0.0, %v426
    %v428 = vpop.f32.mrf.mxu0
    %429 = vdwg.mxu0
    %v430 = vsub.f32 0.0, %v427
    %v431 = vmul.f32 %v430, 1.442695
    %v432 = vpow.pop %v431
    %v433 = vadd.f32 %v432, 1.0
    %v434 = vrcp.pop %v433
    %v435 = vmul.f32 1.0, %v434
    %v436 = vlaneseq
    %v437 = vshrl.u32 %v436, 7
    %v438 = vsub.s32 0, %v437
    %v439 = vrot.slane %v435, %v438
    %441 = vbcast.lane.b32.xlu0 %v439, 256
    %v442 = vpop.permute.xlu0 %441
    %s444 = sor.u32 256, 8
    %445 = vbcast.lane.b32.xlu0 %v439, %s444
    %v446 = vpop.permute.xlu0 %445
    %s448 = sor.u32 256, 16
    %449 = vbcast.lane.b32.xlu0 %v439, %s448
    %v450 = vpop.permute.xlu0 %449
    %s452 = sor.u32 256, 24
    %453 = vbcast.lane.b32.xlu0 %v439, %s452
    %v454 = vpop.permute.xlu0 %453
    %v455 = vlaneseq
    %v456 = vshrl.u32 %v455, 7
    %v457 = vsub.s32 1, %v456
    %v458 = vrot.slane %v435, %v457
    %460 = vbcast.lane.b32.xlu0 %v458, 256
    %v461 = vpop.permute.xlu0 %460
    %s463 = sor.u32 256, 8
    %464 = vbcast.lane.b32.xlu0 %v458, %s463
    %v465 = vpop.permute.xlu0 %464
    %s467 = sor.u32 256, 16
    %468 = vbcast.lane.b32.xlu0 %v458, %s467
    %v469 = vpop.permute.xlu0 %468
    %s471 = sor.u32 256, 24
    %472 = vbcast.lane.b32.xlu0 %v458, %s471
    %v473 = vpop.permute.xlu0 %472
    %vm474 = vcmask 7168
    %475 = vst.msk [vmem:[%s3] sm:$0xff] %vm474, %v442
    %476 = vst.msk [vmem:[%s3 + $0x8] sm:$0xff] %vm474, %v446
    %477 = vst.msk [vmem:[%s3 + $0x10] sm:$0xff] %vm474, %v450
    %478 = vst.msk [vmem:[%s3 + $0x18] sm:$0xff] %vm474, %v454
    %479 = vst.msk [vmem:[%s3 + $0x20] sm:$0xff] %vm474, %v461
    %480 = vst.msk [vmem:[%s3 + $0x28] sm:$0xff] %vm474, %v465
    %481 = vst.msk [vmem:[%s3 + $0x30] sm:$0xff] %vm474, %v469
    %482 = vst.msk [vmem:[%s3 + $0x38] sm:$0xff] %vm474, %v473
    // Predicated region
    $region18: #{tpu_custom_call.1} parent=1 // pred_check
      _
    $region19: #{tpu_custom_call.1} parent=1 // pred_check_branch
      %484 = sbr.rel (0) target = $region21
    $region20: #{tpu_custom_call.1} parent=1 // pred_region
      _
    $region21: #{tpu_custom_call.1} parent=1 // pred_fallthru
      _
    // Predicated region
    $region22: #{tpu_custom_call.1} parent=1 // pred_check
      _
    $region23: #{tpu_custom_call.1} parent=1 // pred_check_branch
      %486 = sbr.rel (0) target = $region25
    $region24: #{tpu_custom_call.1} parent=1 // pred_region
      _
    $region25: #{tpu_custom_call.1} parent=1 // pred_fallthru
      _
    %487 = vsyncpa [#allocation3], 1

</llo_original>
